<compile_context>
chip_gen: v6e
topology: v6e:2x2x1
jax: 0.10.0
libtpu: 0.0.40
codegen_flags: <defaults>
</compile_context>

<pallas_src>
import jax
import jax.numpy as jnp
from jax.experimental import pallas as pl
from jax.experimental.pallas import tpu as pltpu


_LANE = 128               # lane width; client axis padded to a multiple of this
_MAX_CLIENT_BLOCK = 1024  # max clients per grid step (8 f32 vregs per row)


def _cdiv(a, b):
    return -(-a // b)


def _num_tensorcores():
    """Best-effort trace-time query of TensorCores per chip (v7x: 2)."""
    try:
        info = pltpu.get_tpu_info()
    except Exception:
        return 1
    for attr in ("tensor_cores_per_chip", "tensorcores_per_chip",
                 "tensor_core_count", "num_tensor_cores", "num_tensorcores",
                 "num_cores", "core_count"):
        n = getattr(info, attr, None)
        if isinstance(n, int) and 1 <= n <= 8:
            return n
    return 1


def _choose_client_tiling(num_clients):
    """Pick (padded_clients, client_block, grid) per generation.

    Single-TC parts (v5e/v6e): 1 grid step (grid is just a serial loop there).
    Multi-TC parts (v7x): at least num_TC steps so "parallel" shards clients.
    Blocks are capped at _MAX_CLIENT_BLOCK lanes and padded to 128.
    """
    c128 = _LANE * _cdiv(num_clients, _LANE)
    grid = max(_num_tensorcores(), _cdiv(c128, _MAX_CLIENT_BLOCK))
    block_c = _LANE * _cdiv(_cdiv(c128, grid), _LANE)
    return block_c * grid, block_c, grid


def _make_rnn_kernel(n_sets):
    """Kernel over one client block; runs n_sets forward passes (e.g. support
    and query sets of a FOMAML step) sharing the single per-client params DMA.
    """

    def kernel(p_ref, *refs):
        # p_ref : (5, Cb) f32  per-client [w_ih, w_hh, b_ih+b_hh, w_fc, b_fc]
        # refs  : n_sets x_refs (T, B_i, Cb), then n_sets o_refs (B_i, Cb)
        x_refs, o_refs = refs[:n_sets], refs[n_sets:]

        # Parameter rows kept as (1, Cb): the multiplies sublane-broadcast
        # implicitly (no (B, Cb) broadcast materialized / loop-carried).
        w_ih = p_ref[0:1, :]
        w_hh = p_ref[1:2, :]
        b = p_ref[2:3, :]          # b_ih + b_hh (pre-summed on the host)
        w_fc = p_ref[3:4, :]
        b_fc = p_ref[4:5, :]

        for x_ref, o_ref in zip(x_refs, o_refs):
            T, B, Cb = x_ref.shape
            h = jnp.zeros((B, Cb), jnp.float32)
            # Fully unrolled serial recurrence; x loaded per timestep so the
            # live vreg set stays small even at 1024-lane client blocks.
            for t in range(T):
                h = jnp.tanh(x_ref[t] * w_ih + b + h * w_hh)
            # Linear head on the last hidden state (torch: fc(out[:, -1, :])).
            o_ref[...] = h * w_fc + b_fc

    return kernel


def pack_params(w_ih, w_hh, b_ih, b_hh, w_fc, b_fc):
    """Pack per-client RNN/FC params into one (5, C) f32 array (one DMA)."""
    flat = lambda a: jnp.asarray(a, jnp.float32).reshape(-1)
    return jnp.stack(
        [flat(w_ih), flat(w_hh), flat(b_ih) + flat(b_hh), flat(w_fc), flat(b_fc)],
        axis=0)


def rnn_net_forward_packed(params, xs):
    """Batched-over-clients RNNNet forward, fused over multiple input sets.

    params : (5, C) f32 packed [w_ih, w_hh, b_ih+b_hh, w_fc, b_fc]
    xs     : sequence of (T, B_i, C) f32 arrays, clients on the LAST axis
             (clients-last staging avoids any HBM transpose before the kernel).
    returns: list of (B_i, C) f32 outputs, one per input set.
    """
    xs = [jnp.asarray(x, jnp.float32) for x in xs]
    params = jnp.asarray(params, jnp.float32)
    C = params.shape[1]

    Cp, block_c, grid = _choose_client_tiling(C)
    pad = Cp - C
    if pad:
        params = jnp.pad(params, ((0, 0), (0, pad)))
        xs = [jnp.pad(x, ((0, 0), (0, 0), (0, pad))) for x in xs]

    n_sets = len(xs)
    out_shapes = tuple(
        jax.ShapeDtypeStruct((x.shape[1], Cp), jnp.float32) for x in xs)
    in_specs = [pl.BlockSpec((5, block_c), lambda c: (0, c))] + [
        pl.BlockSpec((x.shape[0], x.shape[1], block_c), lambda c: (0, 0, c))
        for x in xs
    ]
    out_specs = tuple(
        pl.BlockSpec((x.shape[1], block_c), lambda c: (0, c)) for x in xs)

    outs = pl.pallas_call(
        _make_rnn_kernel(n_sets),
        out_shape=out_shapes,
        grid_spec=pltpu.PrefetchScalarGridSpec(
            num_scalar_prefetch=0,
            grid=(grid,),
            in_specs=in_specs,
            out_specs=out_specs,
        ),
        compiler_params=pltpu.CompilerParams(
            # Clients are independent -> shard the (>=2-step) grid across
            # TensorCores on multi-TC parts; on 1-TC parts grid == 1 anyway.
            dimension_semantics=("parallel",)),
    )(params, *xs)

    if not isinstance(outs, (tuple, list)):
        outs = (outs,)
    return [o[:, :C] for o in outs]


def fomaml_support_query_forward(params, x_support, x_query):
    """Support + query forwards for a client block in ONE pallas_call
    (shared params DMA / grid prologue) — the FOMAML fusion lever."""
    return rnn_net_forward_packed(params, [x_support, x_query])


def rnn_net_forward(x, w_ih, w_hh, b_ih, b_hh, w_fc, b_fc):
    """Module-layout compat wrapper.

    x : (C, B, T, 1) or (C, B, T)  — per-client batch_first RNN inputs.
    Per-client params in torch shapes ((C,1,1) / (C,1) / (C,)).
    returns (C, B, 1) f32, matching fc(out[:, -1, :]) per client.

    Prefer staging x clients-last (T, B, C) and calling
    rnn_net_forward_packed directly: that avoids this extra HBM transpose.
    """
    if x.ndim == 4:
        x = x[..., 0]                                   # squeeze input_size=1
    x_tbc = jnp.transpose(jnp.asarray(x, jnp.float32), (2, 1, 0))   # (T, B, C)
    params = pack_params(w_ih, w_hh, b_ih, b_hh, w_fc, b_fc)
    (y,) = rnn_net_forward_packed(params, [x_tbc])      # (B, C)
    return jnp.transpose(y, (1, 0))[..., None]          # (C, B, 1)


def _reference_forward_tbc(x_tbc, w_ih, w_hh, b_ih, b_hh, w_fc, b_fc):
    """Pure-JAX reference mirroring per-client torch.nn.RNN(tanh) + Linear.

    x_tbc: (T, B, C); returns (B, C)."""
    flat = lambda a: jnp.asarray(a, jnp.float32).reshape(-1)
    w_ih, w_hh, b_ih, b_hh, w_fc, b_fc = map(
        flat, (w_ih, w_hh, b_ih, b_hh, w_fc, b_fc))
    T, B, C = x_tbc.shape
    h = jnp.zeros((B, C), jnp.float32)
    for t in range(T):
        h = jnp.tanh(x_tbc[t] * w_ih + b_ih + h * w_hh + b_hh)
    return h * w_fc + b_fc


def _make_client_params(key, C, bound=1.0):
    # torch default init range = 1/sqrt(hidden_size) = 1 for hidden_size=1.
    ks = jax.random.split(key, 6)
    w_ih = jax.random.uniform(ks[0], (C, 1, 1), minval=-bound, maxval=bound)
    w_hh = jax.random.uniform(ks[1], (C, 1, 1), minval=-bound, maxval=bound)
    b_ih = jax.random.uniform(ks[2], (C, 1), minval=-bound, maxval=bound)
    b_hh = jax.random.uniform(ks[3], (C, 1), minval=-bound, maxval=bound)
    w_fc = jax.random.uniform(ks[4], (C, 1, 1), minval=-bound, maxval=bound)
    b_fc = jax.random.uniform(ks[5], (C, 1), minval=-bound, maxval=bound)
    return w_ih, w_hh, b_ih, b_hh, w_fc, b_fc


if __name__ == "__main__":
    # RNNNet config from the module: input_size=1, hidden_size=1, seq_len=6,
    # output_size=1, num_layers=1.  Many FOMAML clients batched per call.
    T = 6
    Bs, Bq = 8, 16        # support / query batch per client
    C = 256               # clients batched per pallas_call

    key = jax.random.PRNGKey(0)
    kp, kxs, kxq = jax.random.split(key, 3)
    p_raw = _make_client_params(kp, C)
    # Inputs staged clients-last (T, B, C): no HBM transpose on the hot path.
    x_sup = jax.random.normal(kxs, (T, Bs, C), dtype=jnp.float32)
    x_qry = jax.random.normal(kxq, (T, Bq, C), dtype=jnp.float32)

    params = pack_params(*p_raw)

    # Fused support+query forward in a single pallas_call (shared params DMA).
    y_sup, y_qry = jax.block_until_ready(
        fomaml_support_query_forward(params, x_sup, x_qry))
    ref_sup = _reference_forward_tbc(x_sup, *p_raw)
    ref_qry = _reference_forward_tbc(x_qry, *p_raw)
    assert y_sup.shape == (Bs, C) and y_qry.shape == (Bq, C)
    assert jnp.allclose(y_sup, ref_sup, atol=1e-5, rtol=1e-5)
    assert jnp.allclose(y_qry, ref_qry, atol=1e-5, rtol=1e-5)

    # Module-layout compat path + small client count (exercises lane padding).
    C2, B2 = 5, 8
    key2 = jax.random.PRNGKey(1)
    kp2, kx2 = jax.random.split(key2)
    p2_raw = _make_client_params(kp2, C2)
    x2 = jax.random.normal(kx2, (C2, B2, T, 1), dtype=jnp.float32)
    out2 = jax.block_until_ready(rnn_net_forward(x2, *p2_raw))
    ref2 = _reference_forward_tbc(
        jnp.transpose(x2[..., 0], (2, 1, 0)), *p2_raw)          # (B2, C2)
    assert out2.shape == (C2, B2, 1)
    assert jnp.allclose(out2[..., 0], jnp.transpose(ref2, (1, 0)),
                        atol=1e-5, rtol=1e-5)

    # TODO(synk): the federated meta-training orchestration (meta_training /
    # Testing: client scheduling, weighted aggregation, metric file I/O) and
    # the FOMAML inner-loop gradient/update math are host-side logic with no
    # clean kernel equivalent and are intentionally not reproduced here.
    print("KERNEL_OK")
</pallas_src>

<mosaic_0001>
module attributes {stable_mosaic.version = 11 : i64} {
  func.func @kernel(%arg0: i32, %arg1: memref<5x256xf32, #tpu.memory_space<vmem>>, %arg2: memref<6x8x256xf32, #tpu.memory_space<vmem>>, %arg3: memref<6x16x256xf32, #tpu.memory_space<vmem>>, %arg4: memref<8x256xf32, #tpu.memory_space<vmem>>, %arg5: memref<16x256xf32, #tpu.memory_space<vmem>>) attributes {dimension_semantics = [#tpu.dimension_semantics<parallel>], iteration_bounds = array<i64: 1>, scalar_prefetch = 0 : i64, scratch_operands = 0 : i64, tpu.core_type = #tpu.core_type<tc>, window_params = [{transform_indices = @transform_0, window_bounds = array<i64: 5, 256>}, {transform_indices = @transform_1, window_bounds = array<i64: 6, 8, 256>}, {transform_indices = @transform_2, window_bounds = array<i64: 6, 16, 256>}, {transform_indices = @transform_3, window_bounds = array<i64: 8, 256>}, {transform_indices = @transform_4, window_bounds = array<i64: 16, 256>}]} {
    %c0 = arith.constant 0 : index
    %c0_0 = arith.constant 0 : index
    %0 = vector.load %arg1[%c0, %c0_0] : memref<5x256xf32, #tpu.memory_space<vmem>>, vector<1x256xf32>
    %c1 = arith.constant 1 : index
    %c0_1 = arith.constant 0 : index
    %1 = vector.load %arg1[%c1, %c0_1] : memref<5x256xf32, #tpu.memory_space<vmem>>, vector<1x256xf32>
    %c2 = arith.constant 2 : index
    %c0_2 = arith.constant 0 : index
    %2 = vector.load %arg1[%c2, %c0_2] : memref<5x256xf32, #tpu.memory_space<vmem>>, vector<1x256xf32>
    %c3 = arith.constant 3 : index
    %c0_3 = arith.constant 0 : index
    %3 = vector.load %arg1[%c3, %c0_3] : memref<5x256xf32, #tpu.memory_space<vmem>>, vector<1x256xf32>
    %c4 = arith.constant 4 : index
    %c0_4 = arith.constant 0 : index
    %4 = vector.load %arg1[%c4, %c0_4] : memref<5x256xf32, #tpu.memory_space<vmem>>, vector<1x256xf32>
    %cst = arith.constant 0.000000e+00 : f32
    %5 = vector.broadcast %cst : f32 to vector<8x256xf32>
    %c0_5 = arith.constant 0 : index
    %c0_6 = arith.constant 0 : index
    %c0_7 = arith.constant 0 : index
    %6 = vector.load %arg2[%c0_5, %c0_6, %c0_7] : memref<6x8x256xf32, #tpu.memory_space<vmem>>, vector<1x8x256xf32>
    %7 = vector.shape_cast %6 : vector<1x8x256xf32> to vector<8x256xf32>
    %8 = vector.broadcast %0 : vector<1x256xf32> to vector<8x256xf32>
    %9 = arith.mulf %7, %8 : vector<8x256xf32>
    %10 = vector.broadcast %2 : vector<1x256xf32> to vector<8x256xf32>
    %11 = arith.addf %9, %10 : vector<8x256xf32>
    %12 = vector.broadcast %1 : vector<1x256xf32> to vector<8x256xf32>
    %13 = arith.mulf %5, %12 : vector<8x256xf32>
    %14 = arith.addf %11, %13 : vector<8x256xf32>
    %15 = math.tanh %14 : vector<8x256xf32>
    %c1_8 = arith.constant 1 : index
    %c0_9 = arith.constant 0 : index
    %c0_10 = arith.constant 0 : index
    %16 = vector.load %arg2[%c1_8, %c0_9, %c0_10] : memref<6x8x256xf32, #tpu.memory_space<vmem>>, vector<1x8x256xf32>
    %17 = vector.shape_cast %16 : vector<1x8x256xf32> to vector<8x256xf32>
    %18 = vector.broadcast %0 : vector<1x256xf32> to vector<8x256xf32>
    %19 = arith.mulf %17, %18 : vector<8x256xf32>
    %20 = vector.broadcast %2 : vector<1x256xf32> to vector<8x256xf32>
    %21 = arith.addf %19, %20 : vector<8x256xf32>
    %22 = vector.broadcast %1 : vector<1x256xf32> to vector<8x256xf32>
    %23 = arith.mulf %15, %22 : vector<8x256xf32>
    %24 = arith.addf %21, %23 : vector<8x256xf32>
    %25 = math.tanh %24 : vector<8x256xf32>
    %c2_11 = arith.constant 2 : index
    %c0_12 = arith.constant 0 : index
    %c0_13 = arith.constant 0 : index
    %26 = vector.load %arg2[%c2_11, %c0_12, %c0_13] : memref<6x8x256xf32, #tpu.memory_space<vmem>>, vector<1x8x256xf32>
    %27 = vector.shape_cast %26 : vector<1x8x256xf32> to vector<8x256xf32>
    %28 = vector.broadcast %0 : vector<1x256xf32> to vector<8x256xf32>
    %29 = arith.mulf %27, %28 : vector<8x256xf32>
    %30 = vector.broadcast %2 : vector<1x256xf32> to vector<8x256xf32>
    %31 = arith.addf %29, %30 : vector<8x256xf32>
    %32 = vector.broadcast %1 : vector<1x256xf32> to vector<8x256xf32>
    %33 = arith.mulf %25, %32 : vector<8x256xf32>
    %34 = arith.addf %31, %33 : vector<8x256xf32>
    %35 = math.tanh %34 : vector<8x256xf32>
    %c3_14 = arith.constant 3 : index
    %c0_15 = arith.constant 0 : index
    %c0_16 = arith.constant 0 : index
    %36 = vector.load %arg2[%c3_14, %c0_15, %c0_16] : memref<6x8x256xf32, #tpu.memory_space<vmem>>, vector<1x8x256xf32>
    %37 = vector.shape_cast %36 : vector<1x8x256xf32> to vector<8x256xf32>
    %38 = vector.broadcast %0 : vector<1x256xf32> to vector<8x256xf32>
    %39 = arith.mulf %37, %38 : vector<8x256xf32>
    %40 = vector.broadcast %2 : vector<1x256xf32> to vector<8x256xf32>
    %41 = arith.addf %39, %40 : vector<8x256xf32>
    %42 = vector.broadcast %1 : vector<1x256xf32> to vector<8x256xf32>
    %43 = arith.mulf %35, %42 : vector<8x256xf32>
    %44 = arith.addf %41, %43 : vector<8x256xf32>
    %45 = math.tanh %44 : vector<8x256xf32>
    %c4_17 = arith.constant 4 : index
    %c0_18 = arith.constant 0 : index
    %c0_19 = arith.constant 0 : index
    %46 = vector.load %arg2[%c4_17, %c0_18, %c0_19] : memref<6x8x256xf32, #tpu.memory_space<vmem>>, vector<1x8x256xf32>
    %47 = vector.shape_cast %46 : vector<1x8x256xf32> to vector<8x256xf32>
    %48 = vector.broadcast %0 : vector<1x256xf32> to vector<8x256xf32>
    %49 = arith.mulf %47, %48 : vector<8x256xf32>
    %50 = vector.broadcast %2 : vector<1x256xf32> to vector<8x256xf32>
    %51 = arith.addf %49, %50 : vector<8x256xf32>
    %52 = vector.broadcast %1 : vector<1x256xf32> to vector<8x256xf32>
    %53 = arith.mulf %45, %52 : vector<8x256xf32>
    %54 = arith.addf %51, %53 : vector<8x256xf32>
    %55 = math.tanh %54 : vector<8x256xf32>
    %c5 = arith.constant 5 : index
    %c0_20 = arith.constant 0 : index
    %c0_21 = arith.constant 0 : index
    %56 = vector.load %arg2[%c5, %c0_20, %c0_21] : memref<6x8x256xf32, #tpu.memory_space<vmem>>, vector<1x8x256xf32>
    %57 = vector.shape_cast %56 : vector<1x8x256xf32> to vector<8x256xf32>
    %58 = vector.broadcast %0 : vector<1x256xf32> to vector<8x256xf32>
    %59 = arith.mulf %57, %58 : vector<8x256xf32>
    %60 = vector.broadcast %2 : vector<1x256xf32> to vector<8x256xf32>
    %61 = arith.addf %59, %60 : vector<8x256xf32>
    %62 = vector.broadcast %1 : vector<1x256xf32> to vector<8x256xf32>
    %63 = arith.mulf %55, %62 : vector<8x256xf32>
    %64 = arith.addf %61, %63 : vector<8x256xf32>
    %65 = math.tanh %64 : vector<8x256xf32>
    %66 = vector.broadcast %3 : vector<1x256xf32> to vector<8x256xf32>
    %67 = arith.mulf %65, %66 : vector<8x256xf32>
    %68 = vector.broadcast %4 : vector<1x256xf32> to vector<8x256xf32>
    %69 = arith.addf %67, %68 : vector<8x256xf32>
    %c0_22 = arith.constant 0 : index
    %c0_23 = arith.constant 0 : index
    %70 = vector.load %arg4[%c0_22, %c0_23] : memref<8x256xf32, #tpu.memory_space<vmem>>, vector<8x256xf32>
    tpu.vector_store %arg4[%c0_22, %c0_23], %69 {strides = array<i32>} : memref<8x256xf32, #tpu.memory_space<vmem>>, vector<8x256xf32>,
    %cst_24 = arith.constant 0.000000e+00 : f32
    %71 = vector.broadcast %cst_24 : f32 to vector<16x256xf32>
    %c0_25 = arith.constant 0 : index
    %c0_26 = arith.constant 0 : index
    %c0_27 = arith.constant 0 : index
    %72 = vector.load %arg3[%c0_25, %c0_26, %c0_27] : memref<6x16x256xf32, #tpu.memory_space<vmem>>, vector<1x16x256xf32>
    %73 = vector.shape_cast %72 : vector<1x16x256xf32> to vector<16x256xf32>
    %74 = vector.broadcast %0 : vector<1x256xf32> to vector<16x256xf32>
    %75 = arith.mulf %73, %74 : vector<16x256xf32>
    %76 = vector.broadcast %2 : vector<1x256xf32> to vector<16x256xf32>
    %77 = arith.addf %75, %76 : vector<16x256xf32>
    %78 = vector.broadcast %1 : vector<1x256xf32> to vector<16x256xf32>
    %79 = arith.mulf %71, %78 : vector<16x256xf32>
    %80 = arith.addf %77, %79 : vector<16x256xf32>
    %81 = math.tanh %80 : vector<16x256xf32>
    %c1_28 = arith.constant 1 : index
    %c0_29 = arith.constant 0 : index
    %c0_30 = arith.constant 0 : index
    %82 = vector.load %arg3[%c1_28, %c0_29, %c0_30] : memref<6x16x256xf32, #tpu.memory_space<vmem>>, vector<1x16x256xf32>
    %83 = vector.shape_cast %82 : vector<1x16x256xf32> to vector<16x256xf32>
    %84 = vector.broadcast %0 : vector<1x256xf32> to vector<16x256xf32>
    %85 = arith.mulf %83, %84 : vector<16x256xf32>
    %86 = vector.broadcast %2 : vector<1x256xf32> to vector<16x256xf32>
    %87 = arith.addf %85, %86 : vector<16x256xf32>
    %88 = vector.broadcast %1 : vector<1x256xf32> to vector<16x256xf32>
    %89 = arith.mulf %81, %88 : vector<16x256xf32>
    %90 = arith.addf %87, %89 : vector<16x256xf32>
    %91 = math.tanh %90 : vector<16x256xf32>
    %c2_31 = arith.constant 2 : index
    %c0_32 = arith.constant 0 : index
    %c0_33 = arith.constant 0 : index
    %92 = vector.load %arg3[%c2_31, %c0_32, %c0_33] : memref<6x16x256xf32, #tpu.memory_space<vmem>>, vector<1x16x256xf32>
    %93 = vector.shape_cast %92 : vector<1x16x256xf32> to vector<16x256xf32>
    %94 = vector.broadcast %0 : vector<1x256xf32> to vector<16x256xf32>
    %95 = arith.mulf %93, %94 : vector<16x256xf32>
    %96 = vector.broadcast %2 : vector<1x256xf32> to vector<16x256xf32>
    %97 = arith.addf %95, %96 : vector<16x256xf32>
    %98 = vector.broadcast %1 : vector<1x256xf32> to vector<16x256xf32>
    %99 = arith.mulf %91, %98 : vector<16x256xf32>
    %100 = arith.addf %97, %99 : vector<16x256xf32>
    %101 = math.tanh %100 : vector<16x256xf32>
    %c3_34 = arith.constant 3 : index
    %c0_35 = arith.constant 0 : index
    %c0_36 = arith.constant 0 : index
    %102 = vector.load %arg3[%c3_34, %c0_35, %c0_36] : memref<6x16x256xf32, #tpu.memory_space<vmem>>, vector<1x16x256xf32>
    %103 = vector.shape_cast %102 : vector<1x16x256xf32> to vector<16x256xf32>
    %104 = vector.broadcast %0 : vector<1x256xf32> to vector<16x256xf32>
    %105 = arith.mulf %103, %104 : vector<16x256xf32>
    %106 = vector.broadcast %2 : vector<1x256xf32> to vector<16x256xf32>
    %107 = arith.addf %105, %106 : vector<16x256xf32>
    %108 = vector.broadcast %1 : vector<1x256xf32> to vector<16x256xf32>
    %109 = arith.mulf %101, %108 : vector<16x256xf32>
    %110 = arith.addf %107, %109 : vector<16x256xf32>
    %111 = math.tanh %110 : vector<16x256xf32>
    %c4_37 = arith.constant 4 : index
    %c0_38 = arith.constant 0 : index
    %c0_39 = arith.constant 0 : index
    %112 = vector.load %arg3[%c4_37, %c0_38, %c0_39] : memref<6x16x256xf32, #tpu.memory_space<vmem>>, vector<1x16x256xf32>
    %113 = vector.shape_cast %112 : vector<1x16x256xf32> to vector<16x256xf32>
    %114 = vector.broadcast %0 : vector<1x256xf32> to vector<16x256xf32>
    %115 = arith.mulf %113, %114 : vector<16x256xf32>
    %116 = vector.broadcast %2 : vector<1x256xf32> to vector<16x256xf32>
    %117 = arith.addf %115, %116 : vector<16x256xf32>
    %118 = vector.broadcast %1 : vector<1x256xf32> to vector<16x256xf32>
    %119 = arith.mulf %111, %118 : vector<16x256xf32>
    %120 = arith.addf %117, %119 : vector<16x256xf32>
    %121 = math.tanh %120 : vector<16x256xf32>
    %c5_40 = arith.constant 5 : index
    %c0_41 = arith.constant 0 : index
    %c0_42 = arith.constant 0 : index
    %122 = vector.load %arg3[%c5_40, %c0_41, %c0_42] : memref<6x16x256xf32, #tpu.memory_space<vmem>>, vector<1x16x256xf32>
    %123 = vector.shape_cast %122 : vector<1x16x256xf32> to vector<16x256xf32>
    %124 = vector.broadcast %0 : vector<1x256xf32> to vector<16x256xf32>
    %125 = arith.mulf %123, %124 : vector<16x256xf32>
    %126 = vector.broadcast %2 : vector<1x256xf32> to vector<16x256xf32>
    %127 = arith.addf %125, %126 : vector<16x256xf32>
    %128 = vector.broadcast %1 : vector<1x256xf32> to vector<16x256xf32>
    %129 = arith.mulf %121, %128 : vector<16x256xf32>
    %130 = arith.addf %127, %129 : vector<16x256xf32>
    %131 = math.tanh %130 : vector<16x256xf32>
    %132 = vector.broadcast %3 : vector<1x256xf32> to vector<16x256xf32>
    %133 = arith.mulf %131, %132 : vector<16x256xf32>
    %134 = vector.broadcast %4 : vector<1x256xf32> to vector<16x256xf32>
    %135 = arith.addf %133, %134 : vector<16x256xf32>
    %c0_43 = arith.constant 0 : index
    %c0_44 = arith.constant 0 : index
    %136 = vector.load %arg5[%c0_43, %c0_44] : memref<16x256xf32, #tpu.memory_space<vmem>>, vector<16x256xf32>
    tpu.vector_store %arg5[%c0_43, %c0_44], %135 {strides = array<i32>} : memref<16x256xf32, #tpu.memory_space<vmem>>, vector<16x256xf32>,
    return
  }
  func.func @transform_0(%arg0: i32) -> (i32, i32) {
    %c0_i32 = arith.constant 0 : i32
    %c0_i32_0 = arith.constant 0 : i32
    return %c0_i32, %arg0 : i32, i32
  }
  func.func @transform_1(%arg0: i32) -> (i32, i32, i32) {
    %c0_i32 = arith.constant 0 : i32
    %c0_i32_0 = arith.constant 0 : i32
    %c0_i32_1 = arith.constant 0 : i32
    return %c0_i32, %c0_i32_0, %arg0 : i32, i32, i32
  }
  func.func @transform_2(%arg0: i32) -> (i32, i32, i32) {
    %c0_i32 = arith.constant 0 : i32
    %c0_i32_0 = arith.constant 0 : i32
    %c0_i32_1 = arith.constant 0 : i32
    return %c0_i32, %c0_i32_0, %arg0 : i32, i32, i32
  }
  func.func @transform_3(%arg0: i32) -> (i32, i32) {
    %c0_i32 = arith.constant 0 : i32
    %c0_i32_0 = arith.constant 0 : i32
    return %c0_i32, %arg0 : i32, i32
  }
  func.func @transform_4(%arg0: i32) -> (i32, i32) {
    %c0_i32 = arith.constant 0 : i32
    %c0_i32_0 = arith.constant 0 : i32
    return %c0_i32, %arg0 : i32, i32
  }
}

</mosaic_0001>

<llo_original>
// kernel: tpu_custom_call.1
$region0: #{tpu_custom_call.1}
  #allocation0 [shape = 'u32[]', space=smem, size = 0x4, offset = 0x4, fixed_abs, tag = 'smem constant byte address 0x4 - core index']
  #allocation1 [shape = 'u32[144,128]{1,0:T(1,128)}', space=vmem, size = 0x12000, scoped, tag = 'internal scratch']
  %s0 = inlined_call_operand.hbm [shape: f32[5,256], index: 0, kind: input, shape index: {}]
  %s1 = inlined_call_operand.hbm [shape: f32[6,8,256], index: 1, kind: input, shape index: {}]
  %s2 = inlined_call_operand.hbm [shape: f32[6,16,256], index: 2, kind: input, shape index: {}]
  %s3 = inlined_call_operand.hbm [shape: f32[8,256], index: 3, kind: output, shape index: {0}]
  %s4 = inlined_call_operand.hbm [shape: f32[16,256], index: 4, kind: output, shape index: {1}]
  %5 = xla_tuple %s3, %s4
  %s6 = sld [smem:[#allocation0]]
  $region42: #{tpu_custom_call.1} parent=0
    _
  %s8 = ssub.s32 1, %s6
  %s9 = scalar_select 0, %s8, %s6
  $region1: #{tpu_custom_call.1} parent=0
    #allocation2 [shape = 'u8[8192]{0}', space=vmem, size = 0x2000, scoped, tag = 'input window, operand 0, single buffered']
    #allocation3 [shape = 's32[1]{0}', space=sflag, size = 0x4, scoped, tag = 'scoped memory for tpu_custom_call.1']
    #allocation4 [shape = 's32[1]{0}', space=sflag, size = 0x4, scoped, tag = 'scoped memory for tpu_custom_call.1']
    #allocation5 [shape = 'u8[49152]{0}', space=vmem, size = 0xc000, scoped, tag = 'input window, operand 1, single buffered']
    #allocation6 [shape = 's32[1]{0}', space=sflag, size = 0x4, scoped, tag = 'scoped memory for tpu_custom_call.1']
    #allocation7 [shape = 'u8[98304]{0}', space=vmem, size = 0x18000, scoped, tag = 'input window, operand 2, single buffered']
    #allocation8 [shape = 'u8[8192]{0}', space=vmem, size = 0x2000, scoped, tag = 'output window, operand 0, single buffered']
    #allocation9 [shape = 'u8[16384]{0}', space=vmem, size = 0x4000, scoped, tag = 'output window, operand 1, single buffered']
    #allocation10 [shape = 's32[1]{0}', space=sflag, size = 0x4, scoped, tag = 'scoped memory for tpu_custom_call.1']
    %10 = vsyncpa [#allocation3], 0
    %11 = vsyncpa [#allocation6], 0
    %12 = vsyncpa [#allocation4], 0
    %13 = vsyncpa [#allocation10], 0
    // Predicated region
    $region2: #{tpu_custom_call.1} parent=1 // pred_check
      _
    $region3: #{tpu_custom_call.1} parent=1 // pred_check_branch
      %15 = sbr.rel (0) target = $region5
    $region4: #{tpu_custom_call.1} parent=1 // pred_region
      %s17 = ssub.s32 256, 256
      %18 = vsyncadd [#allocation3], %s17
      %s20 = sshll.u32 [#allocation2], 4
      %s21 = int_to_ptr.vmem [resolvable:$true] %s20
      %23 = dma.hbm_to_vmem [thread:$0]  %s0, 256, %s21, [#allocation3]
    $region5: #{tpu_custom_call.1} parent=1 // pred_fallthru
      _
    // Predicated region
    $region6: #{tpu_custom_call.1} parent=1 // pred_check
      _
    $region7: #{tpu_custom_call.1} parent=1 // pred_check_branch
      %25 = sbr.rel (0) target = $region9
    $region8: #{tpu_custom_call.1} parent=1 // pred_region
      %s27 = ssub.s32 1536, 1536
      %28 = vsyncadd [#allocation6], %s27
      %s29 = sshll.u32 [#allocation5], 4
      %s30 = int_to_ptr.vmem [resolvable:$true] %s29
      %35 = dma.hbm_to_vmem [thread:$0]  %s1, 1536, %s30, [#allocation6], 256, 256, 16
    $region9: #{tpu_custom_call.1} parent=1 // pred_fallthru
      _
    // Predicated region
    $region10: #{tpu_custom_call.1} parent=1 // pred_check
      _
    $region11: #{tpu_custom_call.1} parent=1 // pred_check_branch
      %37 = sbr.rel (0) target = $region13
    $region12: #{tpu_custom_call.1} parent=1 // pred_region
      %s39 = ssub.s32 3072, 3072
      %40 = vsyncadd [#allocation6], %s39
      %s41 = sshll.u32 [#allocation7], 4
      %s42 = int_to_ptr.vmem [resolvable:$true] %s41
      %47 = dma.hbm_to_vmem [thread:$0]  %s2, 3072, %s42, [#allocation6], 256, 256, 16
    $region13: #{tpu_custom_call.1} parent=1 // pred_fallthru
      _
    // Predicated region
    $region14: #{tpu_custom_call.1} parent=1 // pred_check
      _
    $region15: #{tpu_custom_call.1} parent=1 // pred_check_branch
      %49 = sbr.rel (0) target = $region17
    $region16: #{tpu_custom_call.1} parent=1 // pred_region
      %50 = dma.done [#allocation3], 256
    $region17: #{tpu_custom_call.1} parent=1 // pred_fallthru
      _
    // Predicated region
    $region18: #{tpu_custom_call.1} parent=1 // pred_check
      _
    $region19: #{tpu_custom_call.1} parent=1 // pred_check_branch
      %52 = sbr.rel (0) target = $region21
    $region20: #{tpu_custom_call.1} parent=1 // pred_region
      %53 = dma.done [#allocation6], 1536
    $region21: #{tpu_custom_call.1} parent=1 // pred_fallthru
      _
    // Predicated region
    $region22: #{tpu_custom_call.1} parent=1 // pred_check
      _
    $region23: #{tpu_custom_call.1} parent=1 // pred_check_branch
      %55 = sbr.rel (0) target = $region25
    $region24: #{tpu_custom_call.1} parent=1 // pred_region
      %56 = dma.done [#allocation6], 3072
    $region25: #{tpu_custom_call.1} parent=1 // pred_fallthru
      _
    %v57 = vld [vmem:[#allocation2] ss:$8 sm:$0x3]
    %s58 = scalar_lea.vmem [#allocation2], 1
    %v59 = vld [vmem:[%s58] ss:$8 sm:$0x3]
    %s60 = scalar_lea.vmem [#allocation2], 2
    %v61 = vld [vmem:[%s60] ss:$8 sm:$0x3]
    %s62 = scalar_lea.vmem [#allocation2], 3
    %v63 = vld [vmem:[%s62] ss:$8 sm:$0x3]
    %s64 = scalar_lea.vmem [#allocation2], 4
    %v65 = vld [vmem:[%s64] ss:$8 sm:$0x3]
    %v66 = vld [vmem:[#allocation5] sm:$0xff]
    %v67 = vld [vmem:[#allocation5 + $0x8] sm:$0xff]
    %v69 = vlaneseq
    %v70 = vshrl.u32 %v69, 7
    %v71 = vsub.s32 0, %v70
    %v72 = vrot.slane %v57, %v71
    %v73 = vlaneseq
    %v74 = vshrl.u32 %v73, 7
    %v75 = vsub.s32 1, %v74
    %v76 = vrot.slane %v57, %v75
    %v79 = vmul.f32 %v66, %v72
    %v80 = vmul.f32 %v67, %v76
    %v82 = vlaneseq
    %v83 = vshrl.u32 %v82, 7
    %v84 = vsub.s32 0, %v83
    %v85 = vrot.slane %v61, %v84
    %v86 = vlaneseq
    %v87 = vshrl.u32 %v86, 7
    %v88 = vsub.s32 1, %v87
    %v89 = vrot.slane %v61, %v88
    %v92 = vadd.f32 %v79, %v85
    %v93 = vadd.f32 %v80, %v89
    %v95 = vlaneseq
    %v96 = vshrl.u32 %v95, 7
    %v97 = vsub.s32 0, %v96
    %v98 = vrot.slane %v59, %v97
    %v99 = vlaneseq
    %v100 = vshrl.u32 %v99, 7
    %v101 = vsub.s32 1, %v100
    %v102 = vrot.slane %v59, %v101
    %v105 = vmul.f32 %v98, 0.0
    %v106 = vmul.f32 %v102, 0.0
    %v107 = vadd.f32 %v92, %v105
    %v108 = vadd.f32 %v93, %v106
    %v109 = vtanh.pop %v107
    %v110 = vtanh.pop %v108
    %s111 = scalar_lea.vmem [#allocation5], 16
    %v112 = vld [vmem:[%s111] sm:$0xff]
    %v113 = vld [vmem:[%s111 + $0x8] sm:$0xff]
    %v114 = vmul.f32 %v112, %v72
    %v115 = vmul.f32 %v113, %v76
    %v116 = vadd.f32 %v114, %v85
    %v117 = vadd.f32 %v115, %v89
    %v118 = vmul.f32 %v109, %v98
    %v119 = vmul.f32 %v110, %v102
    %v120 = vadd.f32 %v116, %v118
    %v121 = vadd.f32 %v117, %v119
    %v122 = vtanh.pop %v120
    %v123 = vtanh.pop %v121
    %s124 = scalar_lea.vmem [#allocation5], 32
    %v125 = vld [vmem:[%s124] sm:$0xff]
    %v126 = vld [vmem:[%s124 + $0x8] sm:$0xff]
    %v127 = vmul.f32 %v125, %v72
    %v128 = vmul.f32 %v126, %v76
    %v129 = vadd.f32 %v127, %v85
    %v130 = vadd.f32 %v128, %v89
    %v131 = vmul.f32 %v122, %v98
    %v132 = vmul.f32 %v123, %v102
    %v133 = vadd.f32 %v129, %v131
    %v134 = vadd.f32 %v130, %v132
    %v135 = vtanh.pop %v133
    %v136 = vtanh.pop %v134
    %s137 = scalar_lea.vmem [#allocation5], 48
    %v138 = vld [vmem:[%s137] sm:$0xff]
    %v139 = vld [vmem:[%s137 + $0x8] sm:$0xff]
    %v140 = vmul.f32 %v138, %v72
    %v141 = vmul.f32 %v139, %v76
    %v142 = vadd.f32 %v140, %v85
    %v143 = vadd.f32 %v141, %v89
    %v144 = vmul.f32 %v135, %v98
    %v145 = vmul.f32 %v136, %v102
    %v146 = vadd.f32 %v142, %v144
    %v147 = vadd.f32 %v143, %v145
    %v148 = vtanh.pop %v146
    %v149 = vtanh.pop %v147
    %s150 = scalar_lea.vmem [#allocation5], 64
    %v151 = vld [vmem:[%s150] sm:$0xff]
    %v152 = vld [vmem:[%s150 + $0x8] sm:$0xff]
    %v153 = vmul.f32 %v151, %v72
    %v154 = vmul.f32 %v152, %v76
    %v155 = vadd.f32 %v153, %v85
    %v156 = vadd.f32 %v154, %v89
    %v157 = vmul.f32 %v148, %v98
    %v158 = vmul.f32 %v149, %v102
    %v159 = vadd.f32 %v155, %v157
    %v160 = vadd.f32 %v156, %v158
    %v161 = vtanh.pop %v159
    %v162 = vtanh.pop %v160
    %s163 = scalar_lea.vmem [#allocation5], 80
    %v164 = vld [vmem:[%s163] sm:$0xff]
    %v165 = vld [vmem:[%s163 + $0x8] sm:$0xff]
    %v166 = vmul.f32 %v164, %v72
    %v167 = vmul.f32 %v165, %v76
    %v168 = vadd.f32 %v166, %v85
    %v169 = vadd.f32 %v167, %v89
    %v170 = vmul.f32 %v161, %v98
    %v171 = vmul.f32 %v162, %v102
    %v172 = vadd.f32 %v168, %v170
    %v173 = vadd.f32 %v169, %v171
    %v174 = vtanh.pop %v172
    %v175 = vtanh.pop %v173
    %v177 = vlaneseq
    %v178 = vshrl.u32 %v177, 7
    %v179 = vsub.s32 0, %v178
    %v180 = vrot.slane %v63, %v179
    %v181 = vlaneseq
    %v182 = vshrl.u32 %v181, 7
    %v183 = vsub.s32 1, %v182
    %v184 = vrot.slane %v63, %v183
    %v187 = vmul.f32 %v174, %v180
    %v188 = vmul.f32 %v175, %v184
    %v190 = vlaneseq
    %v191 = vshrl.u32 %v190, 7
    %v192 = vsub.s32 0, %v191
    %v193 = vrot.slane %v65, %v192
    %v194 = vlaneseq
    %v195 = vshrl.u32 %v194, 7
    %v196 = vsub.s32 1, %v195
    %v197 = vrot.slane %v65, %v196
    %v200 = vadd.f32 %v187, %v193
    %v201 = vadd.f32 %v188, %v197
    %202 = vst [vmem:[#allocation8] sm:$0xff] %v200
    %203 = vst [vmem:[#allocation8 + $0x8] sm:$0xff] %v201
    %v204 = vld [vmem:[#allocation7] sm:$0xff]
    %v205 = vld [vmem:[#allocation7 + $0x8] sm:$0xff]
    %v206 = vld [vmem:[#allocation7 + $0x10] sm:$0xff]
    %v207 = vld [vmem:[#allocation7 + $0x18] sm:$0xff]
    %v208 = vmul.f32 %v204, %v72
    %v209 = vmul.f32 %v205, %v76
    %v210 = vmul.f32 %v206, %v72
    %v211 = vmul.f32 %v207, %v76
    %v212 = vadd.f32 %v208, %v85
    %v213 = vadd.f32 %v209, %v89
    %v214 = vadd.f32 %v210, %v85
    %v215 = vadd.f32 %v211, %v89
    %v216 = vadd.f32 %v212, %v105
    %v217 = vadd.f32 %v213, %v106
    %v218 = vadd.f32 %v214, %v105
    %v219 = vadd.f32 %v215, %v106
    %v220 = vtanh.pop %v216
    %v221 = vtanh.pop %v217
    %v222 = vtanh.pop %v218
    %v223 = vtanh.pop %v219
    %s224 = scalar_lea.vmem [#allocation7], 32
    %v225 = vld [vmem:[%s224] sm:$0xff]
    %v226 = vld [vmem:[%s224 + $0x8] sm:$0xff]
    %v227 = vld [vmem:[%s224 + $0x10] sm:$0xff]
    %v228 = vld [vmem:[%s224 + $0x18] sm:$0xff]
    %v229 = vmul.f32 %v225, %v72
    %v230 = vmul.f32 %v226, %v76
    %v231 = vmul.f32 %v227, %v72
    %v232 = vmul.f32 %v228, %v76
    %v233 = vadd.f32 %v229, %v85
    %v234 = vadd.f32 %v230, %v89
    %v235 = vadd.f32 %v231, %v85
    %v236 = vadd.f32 %v232, %v89
    %v237 = vmul.f32 %v220, %v98
    %v238 = vmul.f32 %v221, %v102
    %v239 = vmul.f32 %v222, %v98
    %v240 = vmul.f32 %v223, %v102
    %v241 = vadd.f32 %v233, %v237
    %v242 = vadd.f32 %v234, %v238
    %v243 = vadd.f32 %v235, %v239
    %v244 = vadd.f32 %v236, %v240
    %v245 = vtanh.pop %v241
    %v246 = vtanh.pop %v242
    %v247 = vtanh.pop %v243
    %v248 = vtanh.pop %v244
    %s249 = scalar_lea.vmem [#allocation7], 64
    %v250 = vld [vmem:[%s249] sm:$0xff]
    %v251 = vld [vmem:[%s249 + $0x8] sm:$0xff]
    %v252 = vld [vmem:[%s249 + $0x10] sm:$0xff]
    %v253 = vld [vmem:[%s249 + $0x18] sm:$0xff]
    %v254 = vmul.f32 %v250, %v72
    %v255 = vmul.f32 %v251, %v76
    %v256 = vmul.f32 %v252, %v72
    %v257 = vmul.f32 %v253, %v76
    %v258 = vadd.f32 %v254, %v85
    %v259 = vadd.f32 %v255, %v89
    %v260 = vadd.f32 %v256, %v85
    %v261 = vadd.f32 %v257, %v89
    %v262 = vmul.f32 %v245, %v98
    %v263 = vmul.f32 %v246, %v102
    %v264 = vmul.f32 %v247, %v98
    %v265 = vmul.f32 %v248, %v102
    %v266 = vadd.f32 %v258, %v262
    %v267 = vadd.f32 %v259, %v263
    %v268 = vadd.f32 %v260, %v264
    %v269 = vadd.f32 %v261, %v265
    %v270 = vtanh.pop %v266
    %v271 = vtanh.pop %v267
    %v272 = vtanh.pop %v268
    %v273 = vtanh.pop %v269
    %s274 = scalar_lea.vmem [#allocation7], 96
    %v275 = vld [vmem:[%s274] sm:$0xff]
    %v276 = vld [vmem:[%s274 + $0x8] sm:$0xff]
    %v277 = vld [vmem:[%s274 + $0x10] sm:$0xff]
    %v278 = vld [vmem:[%s274 + $0x18] sm:$0xff]
    %v279 = vmul.f32 %v275, %v72
    %v280 = vmul.f32 %v276, %v76
    %v281 = vmul.f32 %v277, %v72
    %v282 = vmul.f32 %v278, %v76
    %v283 = vadd.f32 %v279, %v85
    %v284 = vadd.f32 %v280, %v89
    %v285 = vadd.f32 %v281, %v85
    %v286 = vadd.f32 %v282, %v89
    %v287 = vmul.f32 %v270, %v98
    %v288 = vmul.f32 %v271, %v102
    %v289 = vmul.f32 %v272, %v98
    %v290 = vmul.f32 %v273, %v102
    %v291 = vadd.f32 %v283, %v287
    %v292 = vadd.f32 %v284, %v288
    %v293 = vadd.f32 %v285, %v289
    %v294 = vadd.f32 %v286, %v290
    %v295 = vtanh.pop %v291
    %v296 = vtanh.pop %v292
    %v297 = vtanh.pop %v293
    %v298 = vtanh.pop %v294
    %s299 = scalar_lea.vmem [#allocation7], 128
    %v300 = vld [vmem:[%s299] sm:$0xff]
    %v301 = vld [vmem:[%s299 + $0x8] sm:$0xff]
    %v302 = vld [vmem:[%s299 + $0x10] sm:$0xff]
    %v303 = vld [vmem:[%s299 + $0x18] sm:$0xff]
    %v304 = vmul.f32 %v300, %v72
    %v305 = vmul.f32 %v301, %v76
    %v306 = vmul.f32 %v302, %v72
    %v307 = vmul.f32 %v303, %v76
    %v308 = vadd.f32 %v304, %v85
    %v309 = vadd.f32 %v305, %v89
    %v310 = vadd.f32 %v306, %v85
    %v311 = vadd.f32 %v307, %v89
    %v312 = vmul.f32 %v295, %v98
    %v313 = vmul.f32 %v296, %v102
    %v314 = vmul.f32 %v297, %v98
    %v315 = vmul.f32 %v298, %v102
    %v316 = vadd.f32 %v308, %v312
    %v317 = vadd.f32 %v309, %v313
    %v318 = vadd.f32 %v310, %v314
    %v319 = vadd.f32 %v311, %v315
    %v320 = vtanh.pop %v316
    %v321 = vtanh.pop %v317
    %v322 = vtanh.pop %v318
    %v323 = vtanh.pop %v319
    %s324 = scalar_lea.vmem [#allocation7], 160
    %v325 = vld [vmem:[%s324] sm:$0xff]
    %v326 = vld [vmem:[%s324 + $0x8] sm:$0xff]
    %v327 = vld [vmem:[%s324 + $0x10] sm:$0xff]
    %v328 = vld [vmem:[%s324 + $0x18] sm:$0xff]
    %v329 = vmul.f32 %v325, %v72
    %v330 = vmul.f32 %v326, %v76
    %v331 = vmul.f32 %v327, %v72
    %v332 = vmul.f32 %v328, %v76
    %v333 = vadd.f32 %v329, %v85
    %v334 = vadd.f32 %v330, %v89
    %v335 = vadd.f32 %v331, %v85
    %v336 = vadd.f32 %v332, %v89
    %v337 = vmul.f32 %v320, %v98
    %v338 = vmul.f32 %v321, %v102
    %v339 = vmul.f32 %v322, %v98
    %v340 = vmul.f32 %v323, %v102
    %v341 = vadd.f32 %v333, %v337
    %v342 = vadd.f32 %v334, %v338
    %v343 = vadd.f32 %v335, %v339
    %v344 = vadd.f32 %v336, %v340
    %v345 = vtanh.pop %v341
    %v346 = vtanh.pop %v342
    %v347 = vtanh.pop %v343
    %v348 = vtanh.pop %v344
    %v349 = vmul.f32 %v345, %v180
    %v350 = vmul.f32 %v346, %v184
    %v351 = vmul.f32 %v347, %v180
    %v352 = vmul.f32 %v348, %v184
    %v353 = vadd.f32 %v349, %v193
    %v354 = vadd.f32 %v350, %v197
    %v355 = vadd.f32 %v351, %v193
    %v356 = vadd.f32 %v352, %v197
    %357 = vst [vmem:[#allocation9] sm:$0xff] %v353
    %358 = vst [vmem:[#allocation9 + $0x8] sm:$0xff] %v354
    %359 = vst [vmem:[#allocation9 + $0x10] sm:$0xff] %v355
    %360 = vst [vmem:[#allocation9 + $0x18] sm:$0xff] %v356
    // Predicated region
    $region26: #{tpu_custom_call.1} parent=1 // pred_check
      _
    $region27: #{tpu_custom_call.1} parent=1 // pred_check_branch
      %362 = sbr.rel (0) target = $region29
    $region28: #{tpu_custom_call.1} parent=1 // pred_region
      %s364 = ssub.s32 256, 256
      %365 = vsyncadd [#allocation4], %s364
      %s367 = sshll.u32 [#allocation8], 4
      %s368 = int_to_ptr.vmem [resolvable:$true] %s367
      %370 = dma.vmem_to_hbm [thread:$0]  %s368, 256, %s3, [#allocation4]
    $region29: #{tpu_custom_call.1} parent=1 // pred_fallthru
      _
    // Predicated region
    $region30: #{tpu_custom_call.1} parent=1 // pred_check
      _
    $region31: #{tpu_custom_call.1} parent=1 // pred_check_branch
      %372 = sbr.rel (0) target = $region33
    $region32: #{tpu_custom_call.1} parent=1 // pred_region
      %s374 = ssub.s32 512, 512
      %375 = vsyncadd [#allocation10], %s374
      %s376 = sshll.u32 [#allocation9], 4
      %s377 = int_to_ptr.vmem [resolvable:$true] %s376
      %382 = dma.vmem_to_hbm [thread:$0]  %s377, 512, %s4, [#allocation10], 256, 256, 16
    $region33: #{tpu_custom_call.1} parent=1 // pred_fallthru
      _
    // Predicated region
    $region34: #{tpu_custom_call.1} parent=1 // pred_check
      _
    $region35: #{tpu_custom_call.1} parent=1 // pred_check_branch
      %384 = sbr.rel (0) target = $region37
    $region36: #{tpu_custom_call.1} parent=1 // pred_region
      %385 = dma.done [#allocation4], 256
    $region37: #{tpu_custom_call.1} parent=1 // pred_fallthru
      _
    // Predicated region
    $region38: #{tpu_custom_call.1} parent=1 // pred_check
      _
    $region39: #{tpu_custom_call.1} parent=1 // pred_check_branch
      %387 = sbr.rel (0) target = $region41
    $region40: #{tpu_custom_call.1} parent=1 // pred_region
      %388 = dma.done [#allocation10], 512
    $region41: #{tpu_custom_call.1} parent=1 // pred_fallthru
      _
    %389 = vsyncpa [#allocation3], 1
    %390 = vsyncpa [#allocation6], 1
    %391 = vsyncpa [#allocation4], 1
    %392 = vsyncpa [#allocation10], 1

</llo_original>
